<compile_context>
chip_gen: v5e
topology: v5e:2x2
jax: 0.10.0
libtpu: 0.0.40
codegen_flags: <defaults>
</compile_context>

<pallas_src>
import functools
from typing import NamedTuple

import jax
import jax.numpy as jnp
import numpy as np
from jax.experimental import pallas as pl
from jax.experimental.pallas import tpu as pltpu


HEAD_LANES = 128  # fused head output width (policy lanes + value lane + zero pad)


def _round_up(v, m):
    return (v + m - 1) // m * m


# ---------------------------------------------------------------------------
# Pallas kernel: embedder linear + ReLU, fused (policy | value) head,
# masked log_softmax, single lane-dense output slab.
# ---------------------------------------------------------------------------
def _policy_kernel(x_ref, w_emb_ref, b_emb_ref, w_heads_ref, b_heads_ref,
                   out_ref, *, action_size):
    # In-kernel bf16 cast of the f32 x tile (cheap VPU op, hidden under DMA).
    x_bf = x_ref[...].astype(jnp.bfloat16)

    # hidden = relu(x @ W_emb + b_emb)   -- bf16 operands, f32 accumulation
    hidden = jnp.dot(x_bf, w_emb_ref[...],
                     preferred_element_type=jnp.float32) + b_emb_ref[...]
    hidden = jnp.maximum(hidden, 0.0)

    # Fused heads: one full-lane-width MXU matmul.
    #   lanes [0, A)   : policy logits
    #   lane  A        : value
    #   lanes (A, 128) : zeros (zero weight columns, zero bias)
    heads = jnp.dot(hidden.astype(w_heads_ref.dtype), w_heads_ref[...],
                    preferred_element_type=jnp.float32) + b_heads_ref[...]

    # Masked, numerically-stable log_softmax over the real action lanes only.
    lane = jax.lax.broadcasted_iota(jnp.int32, heads.shape, dimension=1)
    is_action = lane < action_size
    logits = jnp.where(is_action, heads, -jnp.inf)
    m = jnp.max(logits, axis=1, keepdims=True)
    z = logits - m                                              # padded -> -inf
    lse = jnp.log(jnp.sum(jnp.exp(z), axis=1, keepdims=True))   # exp(-inf) = 0
    logp = z - lse

    # Lane-dense packed output: logp in action lanes, raw head value elsewhere
    # (lane A carries the value; lanes > A are exact zeros).
    out_ref[...] = jnp.where(is_action, logp, heads)


# ---------------------------------------------------------------------------
# One-time parameter preparation (hoisted out of the per-call hot path).
# ---------------------------------------------------------------------------
class PreparedParams(NamedTuple):
    w_emb: jax.Array    # (D_pad, H_pad) bf16
    b_emb: jax.Array    # (1, H_pad)     f32
    w_heads: jax.Array  # (H_pad, 128)   bf16 (policy | value | zero pad)
    b_heads: jax.Array  # (1, 128)       f32
    d_in: int
    action_size: int


def prepare_params(params):
    """Pad / fuse / bf16-cast weights ONCE (not on every forward call)."""
    w_emb, b_emb, w_pol, b_pol, w_val, b_val = params
    d_in, h = w_emb.shape
    a = w_pol.shape[1]
    assert a >= 1, "action_size must be >= 1 (empty action space -> NaN softmax)"
    assert a + 1 <= HEAD_LANES, "action_size + value lane must fit in 128 lanes"

    d_pad = _round_up(d_in, 128)
    h_pad = _round_up(h, 128)

    w_emb_p = jnp.zeros((d_pad, h_pad), jnp.float32).at[:d_in, :h].set(w_emb)
    b_emb_p = jnp.zeros((1, h_pad), jnp.float32).at[:, :h].set(b_emb)

    w_heads = jnp.zeros((h_pad, HEAD_LANES), jnp.float32)
    w_heads = w_heads.at[:h, :a].set(w_pol)
    w_heads = w_heads.at[:h, a].set(w_val[:, 0])
    b_heads = jnp.zeros((1, HEAD_LANES), jnp.float32)
    b_heads = b_heads.at[0, :a].set(b_pol[0])
    b_heads = b_heads.at[0, a].set(b_val[0, 0])

    return PreparedParams(
        w_emb=w_emb_p.astype(jnp.bfloat16),
        b_emb=b_emb_p,
        w_heads=w_heads.astype(jnp.bfloat16),
        b_heads=b_heads,
        d_in=int(d_in),
        action_size=int(a),
    )


# ---------------------------------------------------------------------------
# Batch-tile selection: big tiles for large B, VMEM-aware cap, >=2 grid steps
# when the batch permits (so the "parallel" axis shards across v7x's 2 TCs).
# ---------------------------------------------------------------------------
def _choose_tb(batch, d_pad):
    b8 = _round_up(max(batch, 1), 8)
    tb = min(512, b8)
    # Cap: one f32 x buffer <= ~12 MiB so double-buffering + weights fit the
    # tightest generation (v7x: 64 MiB physical VMEM per TC).
    max_rows = max(8, ((12 << 20) // (4 * d_pad)) // 8 * 8)
    tb = min(tb, max_rows)
    # Prefer at least 2 grid steps when the batch is big enough to split.
    if b8 >= 16 and b8 <= tb:
        tb = _round_up((b8 + 1) // 2, 8)
    return tb


# ---------------------------------------------------------------------------
# Hot-path wrapper: flatten x, (optionally) pad, call the kernel, slice outputs.
# ---------------------------------------------------------------------------
def categorical_policy_forward(x_nchw, kp: PreparedParams):
    """x_nchw: (B, C, H, W) float32.  Returns (log_probs (B, A), value (B,))."""
    b = x_nchw.shape[0]
    d_pad, h_pad = kp.w_emb.shape
    a = kp.action_size

    x_flat = x_nchw.reshape(b, -1).astype(jnp.float32)  # row-major == torch.flatten
    assert x_flat.shape[1] == kp.d_in

    tb = _choose_tb(b, d_pad)
    b_pad = _round_up(b, tb)

    # Pad only when the shapes are ragged; f32 goes straight to the kernel
    # (bf16 cast happens inside the kernel) -> no materialized f32+bf16 copies.
    pad_rows = b_pad - b
    pad_cols = d_pad - kp.d_in
    x_in = x_flat if (pad_rows == 0 and pad_cols == 0) else jnp.pad(
        x_flat, ((0, pad_rows), (0, pad_cols)))

    grid = (b_pad // tb,)

    # Advisory cost / bytes for XLA's scheduler around this mem-bound call.
    flops = 2 * b_pad * d_pad * h_pad + 2 * b_pad * h_pad * HEAD_LANES
    bytes_accessed = (b_pad * d_pad * 4                 # x (f32 in)
                      + d_pad * h_pad * 2               # W_emb (bf16)
                      + h_pad * HEAD_LANES * 2          # fused head W (bf16)
                      + (h_pad + HEAD_LANES) * 4        # biases (f32)
                      + b_pad * HEAD_LANES * 4)         # output slab (f32)
    cost = pl.CostEstimate(flops=flops,
                           transcendentals=b_pad * HEAD_LANES,
                           bytes_accessed=bytes_accessed)

    # Real VMEM budget: double-buffered x tile + output slab, single-buffered
    # resident weights, plus margin for compiler scratch.
    vmem_bytes = (2 * tb * d_pad * 4
                  + 2 * tb * HEAD_LANES * 4
                  + d_pad * h_pad * 2
                  + h_pad * HEAD_LANES * 2
                  + 2 * 8 * HEAD_LANES * 4)
    vmem_limit = min(vmem_bytes + (16 << 20), 96 << 20)

    kernel = functools.partial(_policy_kernel, action_size=a)
    out = pl.pallas_call(
        kernel,
        out_shape=jax.ShapeDtypeStruct((b_pad, HEAD_LANES), jnp.float32),
        grid=grid,
        in_specs=[
            # x tile: f32, double-buffered, streamed per grid step.
            pl.BlockSpec((tb, d_pad), lambda i: (i, 0)),
            # Constant-index weights: VMEM-resident, single-buffered.
            pl.BlockSpec((d_pad, h_pad), lambda i: (0, 0),
                         pipeline_mode=pl.Buffered(1)),
            pl.BlockSpec((1, h_pad), lambda i: (0, 0),
                         pipeline_mode=pl.Buffered(1)),
            pl.BlockSpec((h_pad, HEAD_LANES), lambda i: (0, 0),
                         pipeline_mode=pl.Buffered(1)),
            pl.BlockSpec((1, HEAD_LANES), lambda i: (0, 0),
                         pipeline_mode=pl.Buffered(1)),
        ],
        out_specs=pl.BlockSpec((tb, HEAD_LANES), lambda i: (i, 0)),
        compiler_params=pltpu.CompilerParams(
            dimension_semantics=("parallel",),
            vmem_limit_bytes=vmem_limit),
        cost_estimate=cost,
    )(x_in, kp.w_emb, kp.b_emb, kp.w_heads, kp.b_heads)

    # Rows >= B are padding garbage; only the :B slice is meaningful.
    log_probs = out[:b, :a]
    value = out[:b, a]
    return log_probs, value


# ---------------------------------------------------------------------------
# Deterministic parameter initialization (orthogonal_init semantics)
# ---------------------------------------------------------------------------
def _orthogonal(key, out_features, in_features, gain):
    """PyTorch-style orthogonal init on a (out, in) weight, returned as (in, out)."""
    rows, cols = out_features, in_features
    flat = jax.random.normal(key, (max(rows, cols), min(rows, cols)),
                             dtype=jnp.float32)
    q, r = jnp.linalg.qr(flat)
    q = q * jnp.sign(jnp.diag(r))[None, :]
    if rows < cols:
        q = q.T  # now (rows, cols)
    w = gain * q[:rows, :cols]           # (out, in), like nn.Linear.weight
    return w.T.astype(jnp.float32)       # kernel uses (in, out)


def make_params(key, in_dim, hidden_dim, action_size):
    k_emb, k_pol, k_val = jax.random.split(key, 3)
    relu_gain = float(np.sqrt(2.0))  # nn.init.calculate_gain('relu')
    w_emb = _orthogonal(k_emb, hidden_dim, in_dim, relu_gain)
    b_emb = jnp.zeros((1, hidden_dim), jnp.float32)
    # fc_policy: orthogonal_init(..., gain=0.01), bias = 0
    w_pol = _orthogonal(k_pol, action_size, hidden_dim, 0.01)
    b_pol = jnp.zeros((1, action_size), jnp.float32)
    # fc_value: orthogonal_init(..., gain=1.0), bias = 0
    w_val = _orthogonal(k_val, 1, hidden_dim, 1.0)
    b_val = jnp.zeros((1, 1), jnp.float32)
    return (w_emb, b_emb, w_pol, b_pol, w_val, b_val)


if __name__ == "__main__":
    key = jax.random.PRNGKey(0)
    k_x, k_p = jax.random.split(key)

    B, C, Hs, Ws = 2, 4, 16, 16          # small NCHW observation
    hidden_dim = 32                       # embedder.output_dim
    action_size = 15                      # procgen action space size

    x = jax.random.normal(k_x, (B, C, Hs, Ws), dtype=jnp.float32)
    params = make_params(k_p, C * Hs * Ws, hidden_dim, action_size)
    kparams = prepare_params(params)      # one-time weight fuse/pad/cast

    log_probs, value = categorical_policy_forward(x, kparams)
    jax.block_until_ready((log_probs, value))

    # Reference check in plain JAX using the same bf16-operand / f32-accumulate path.
    w_emb, b_emb, w_pol, b_pol, w_val, b_val = params
    x_bf = x.reshape(B, -1).astype(jnp.bfloat16)
    hid = jnp.maximum(
        jnp.dot(x_bf, w_emb.astype(jnp.bfloat16),
                preferred_element_type=jnp.float32) + b_emb, 0.0)
    hid_bf = hid.astype(jnp.bfloat16)
    logits = jnp.dot(hid_bf, w_pol.astype(jnp.bfloat16),
                     preferred_element_type=jnp.float32) + b_pol
    ref_logp = jax.nn.log_softmax(logits, axis=1)
    ref_val = (jnp.dot(hid_bf, w_val.astype(jnp.bfloat16),
                       preferred_element_type=jnp.float32) + b_val).reshape(-1)

    assert np.allclose(np.asarray(log_probs), np.asarray(ref_logp),
                       atol=5e-3, rtol=5e-3)
    assert np.allclose(np.asarray(value), np.asarray(ref_val),
                       atol=5e-3, rtol=5e-3)
    assert np.allclose(np.asarray(jnp.exp(log_probs)).sum(axis=1), 1.0, atol=1e-5)
    assert log_probs.shape == (B, action_size) and value.shape == (B,)

    print("KERNEL_OK")
</pallas_src>

<mosaic_0001>
module attributes {stable_mosaic.version = 11 : i64} {
  func.func @_policy_kernel(%arg0: i32, %arg1: memref<8x1024xf32, #tpu.memory_space<vmem>>, %arg2: memref<1024x128xbf16, #tpu.memory_space<vmem>>, %arg3: memref<1x128xf32, #tpu.memory_space<vmem>>, %arg4: memref<128x128xbf16, #tpu.memory_space<vmem>>, %arg5: memref<1x128xf32, #tpu.memory_space<vmem>>, %arg6: memref<8x128xf32, #tpu.memory_space<vmem>>) attributes {dimension_semantics = [#tpu.dimension_semantics<parallel>], iteration_bounds = array<i64: 1>, scalar_prefetch = 0 : i64, scratch_operands = 0 : i64, tpu.core_type = #tpu.core_type<tc>, window_params = [{transform_indices = @transform_0, window_bounds = array<i64: 8, 1024>}, {pipeline_mode = #tpu.pipeline_mode<synchronous>, transform_indices = @transform_1, window_bounds = array<i64: 1024, 128>}, {pipeline_mode = #tpu.pipeline_mode<synchronous>, transform_indices = @transform_2, window_bounds = array<i64: 1, 128>}, {pipeline_mode = #tpu.pipeline_mode<synchronous>, transform_indices = @transform_3, window_bounds = array<i64: 128, 128>}, {pipeline_mode = #tpu.pipeline_mode<synchronous>, transform_indices = @transform_4, window_bounds = array<i64: 1, 128>}, {transform_indices = @transform_5, window_bounds = array<i64: 8, 128>}]} {
    %c0 = arith.constant 0 : index
    %c0_0 = arith.constant 0 : index
    %0 = vector.load %arg1[%c0, %c0_0] : memref<8x1024xf32, #tpu.memory_space<vmem>>, vector<8x1024xf32>
    %1 = arith.truncf %0 : vector<8x1024xf32> to vector<8x1024xbf16>
    %c0_1 = arith.constant 0 : index
    %c0_2 = arith.constant 0 : index
    %2 = vector.load %arg2[%c0_1, %c0_2] : memref<1024x128xbf16, #tpu.memory_space<vmem>>, vector<1024x128xbf16>
    %cst = arith.constant dense<0.000000e+00> : vector<8x128xf32>
    %3 = tpu.matmul %1, %2, %cst {dimension_numbers = #tpu.dot_dimension_numbers<[1], [0], [0], [1], [0, 0, 1, 1], [], []>} : vector<8x1024xbf16>, vector<1024x128xbf16>, vector<8x128xf32> -> vector<8x128xf32>
    %c0_3 = arith.constant 0 : index
    %c0_4 = arith.constant 0 : index
    %4 = vector.load %arg3[%c0_3, %c0_4] : memref<1x128xf32, #tpu.memory_space<vmem>>, vector<1x128xf32>
    %5 = vector.broadcast %4 : vector<1x128xf32> to vector<8x128xf32>
    %6 = arith.addf %3, %5 : vector<8x128xf32>
    %cst_5 = arith.constant 0.000000e+00 : f32
    %7 = vector.broadcast %cst_5 : f32 to vector<8x128xf32>
    %8 = arith.maximumf %6, %7 : vector<8x128xf32>
    %9 = arith.truncf %8 : vector<8x128xf32> to vector<8x128xbf16>
    %c0_6 = arith.constant 0 : index
    %c0_7 = arith.constant 0 : index
    %10 = vector.load %arg4[%c0_6, %c0_7] : memref<128x128xbf16, #tpu.memory_space<vmem>>, vector<128x128xbf16>
    %cst_8 = arith.constant dense<0.000000e+00> : vector<8x128xf32>
    %11 = tpu.matmul %9, %10, %cst_8 {dimension_numbers = #tpu.dot_dimension_numbers<[1], [0], [0], [1], [0, 0, 1, 1], [], []>} : vector<8x128xbf16>, vector<128x128xbf16>, vector<8x128xf32> -> vector<8x128xf32>
    %c0_9 = arith.constant 0 : index
    %c0_10 = arith.constant 0 : index
    %12 = vector.load %arg5[%c0_9, %c0_10] : memref<1x128xf32, #tpu.memory_space<vmem>>, vector<1x128xf32>
    %13 = vector.broadcast %12 : vector<1x128xf32> to vector<8x128xf32>
    %14 = arith.addf %11, %13 : vector<8x128xf32>
    %15 = tpu.iota {dimensions = array<i32: 1>} : vector<8x128xi32>
    %c15_i32 = arith.constant 15 : i32
    %16 = vector.broadcast %c15_i32 : i32 to vector<8x128xi32>
    %17 = arith.cmpi slt, %15, %16 : vector<8x128xi32>
    %cst_11 = arith.constant 0xFF800000 : f32
    %18 = vector.broadcast %cst_11 : f32 to vector<8x128xf32>
    %19 = arith.select %17, %14, %18 : vector<8x128xi1>, vector<8x128xf32>
    %cst_12 = arith.constant dense<0xFF800000> : vector<8xf32>
    %20 = vector.multi_reduction <maximumf>, %19, %cst_12 [1] : vector<8x128xf32> to vector<8xf32>
    %21 = vector.shape_cast %20 : vector<8xf32> to vector<8x1xf32>
    %22 = vector.broadcast %21 : vector<8x1xf32> to vector<8x128xf32>
    %23 = arith.subf %19, %22 : vector<8x128xf32>
    %24 = math.exp %23 : vector<8x128xf32>
    %cst_13 = arith.constant dense<0.000000e+00> : vector<8xf32>
    %25 = vector.multi_reduction <add>, %24, %cst_13 [1] : vector<8x128xf32> to vector<8xf32>
    %26 = vector.shape_cast %25 : vector<8xf32> to vector<8x1xf32>
    %27 = math.log %26 : vector<8x1xf32>
    %28 = vector.broadcast %27 : vector<8x1xf32> to vector<8x128xf32>
    %29 = arith.subf %23, %28 : vector<8x128xf32>
    %30 = arith.select %17, %29, %14 : vector<8x128xi1>, vector<8x128xf32>
    %c0_14 = arith.constant 0 : index
    %c0_15 = arith.constant 0 : index
    %31 = vector.load %arg6[%c0_14, %c0_15] : memref<8x128xf32, #tpu.memory_space<vmem>>, vector<8x128xf32>
    tpu.vector_store %arg6[%c0_14, %c0_15], %30 {strides = array<i32>} : memref<8x128xf32, #tpu.memory_space<vmem>>, vector<8x128xf32>,
    return
  }
  func.func @transform_0(%arg0: i32) -> (i32, i32) {
    %c0_i32 = arith.constant 0 : i32
    %c0_i32_0 = arith.constant 0 : i32
    return %arg0, %c0_i32 : i32, i32
  }
  func.func @transform_1(%arg0: i32) -> (i32, i32) {
    %c0_i32 = arith.constant 0 : i32
    %c0_i32_0 = arith.constant 0 : i32
    %c0_i32_1 = arith.constant 0 : i32
    return %c0_i32, %c0_i32_0 : i32, i32
  }
  func.func @transform_2(%arg0: i32) -> (i32, i32) {
    %c0_i32 = arith.constant 0 : i32
    %c0_i32_0 = arith.constant 0 : i32
    %c0_i32_1 = arith.constant 0 : i32
    return %c0_i32, %c0_i32_0 : i32, i32
  }
  func.func @transform_3(%arg0: i32) -> (i32, i32) {
    %c0_i32 = arith.constant 0 : i32
    %c0_i32_0 = arith.constant 0 : i32
    %c0_i32_1 = arith.constant 0 : i32
    return %c0_i32, %c0_i32_0 : i32, i32
  }
  func.func @transform_4(%arg0: i32) -> (i32, i32) {
    %c0_i32 = arith.constant 0 : i32
    %c0_i32_0 = arith.constant 0 : i32
    %c0_i32_1 = arith.constant 0 : i32
    return %c0_i32, %c0_i32_0 : i32, i32
  }
  func.func @transform_5(%arg0: i32) -> (i32, i32) {
    %c0_i32 = arith.constant 0 : i32
    %c0_i32_0 = arith.constant 0 : i32
    return %arg0, %c0_i32 : i32, i32
  }
}

</mosaic_0001>

<llo_original>
// kernel: tpu_custom_call.1
$region0: #{tpu_custom_call.1}
  #allocation0 [shape = 'u32[]', space=smem, size = 0x4, offset = 0x4, fixed_abs, tag = 'smem constant byte address 0x4 - core index']
  #allocation1 [shape = 'u32[72,128]{1,0:T(1,128)}', space=vmem, size = 0x9000, scoped, tag = 'internal scratch']
  %s0 = inlined_call_operand.hbm [shape: f32[8,1024], index: 0, kind: input, shape index: {}]
  %s1 = inlined_call_operand.hbm [shape: bf16[1024,128], index: 1, kind: input, shape index: {}]
  %s2 = inlined_call_operand.vmem [shape: f32[1,128], index: 2, kind: input, shape index: {}]
  %s3 = inlined_call_operand.hbm [shape: bf16[128,128], index: 3, kind: input, shape index: {}]
  %s4 = inlined_call_operand.vmem [shape: f32[1,128], index: 4, kind: input, shape index: {}]
  %s5 = inlined_call_operand.hbm [shape: f32[8,128], index: 5, kind: output, shape index: {}]
  %s6 = sld [smem:[#allocation0]]
  $region42: #{tpu_custom_call.1} parent=0
    _
  %s8 = ssub.s32 1, %s6
  %s9 = scalar_select 0, %s8, %s6
  $region1: #{tpu_custom_call.1} parent=0
    #allocation2 [shape = 'u8[32768]{0}', space=vmem, size = 0x8000, scoped, tag = 'input window, operand 0, single buffered']
    #allocation3 [shape = 's32[1]{0}', space=sflag, size = 0x4, scoped, tag = 'scoped memory for tpu_custom_call.1']
    #allocation4 [shape = 's32[1]{0}', space=sflag, size = 0x4, scoped, tag = 'scoped memory for tpu_custom_call.1']
    #allocation5 [shape = 'u8[262144]{0}', space=vmem, size = 0x40000, scoped, tag = 'input window, operand 1, single buffered']
    #allocation6 [shape = 's32[1]{0}', space=sflag, size = 0x4, scoped, tag = 'scoped memory for tpu_custom_call.1']
    #allocation7 [shape = 'u8[32768]{0}', space=vmem, size = 0x8000, scoped, tag = 'input window, operand 3, single buffered']
    #allocation8 [shape = 'u8[4096]{0}', space=vmem, size = 0x1000, scoped, tag = 'output window, operand 0, single buffered']
    %10 = vsyncpa [#allocation3], 0
    %11 = vsyncpa [#allocation6], 0
    %12 = vsyncpa [#allocation4], 0
    // Predicated region
    $region2: #{tpu_custom_call.1} parent=1 // pred_check
      _
    $region3: #{tpu_custom_call.1} parent=1 // pred_check_branch
      %14 = sbr.rel (0) target = $region5
    $region4: #{tpu_custom_call.1} parent=1 // pred_region
      %16 = vsyncadd [#allocation3], 0
      %s18 = sshll.u32 %s0, 4
      %s19 = int_to_ptr.hbm [resolvable:$true] %s18
      %s20 = sshll.u32 [#allocation2], 4
      %s21 = int_to_ptr.vmem [resolvable:$true] %s20
      %23 = dma.hbm_to_vmem [thread:$0]  %s19, 1024, %s21, [#allocation3]
    $region5: #{tpu_custom_call.1} parent=1 // pred_fallthru
      _
    // Predicated region
    $region6: #{tpu_custom_call.1} parent=1 // pred_check
      _
    $region7: #{tpu_custom_call.1} parent=1 // pred_check_branch
      %25 = sbr.rel (0) target = $region9
    $region8: #{tpu_custom_call.1} parent=1 // pred_region
      %27 = vsyncadd [#allocation6], 0
      %s28 = sshll.u32 %s1, 4
      %s29 = int_to_ptr.hbm [resolvable:$true] %s28
      %s30 = sshll.u32 [#allocation5], 4
      %s31 = int_to_ptr.vmem [resolvable:$true] %s30
      %36 = dma.hbm_to_vmem [thread:$0]  %s29, 8192, %s31, [#allocation6], 64, 64, 4
    $region9: #{tpu_custom_call.1} parent=1 // pred_fallthru
      _
    // Predicated region
    $region10: #{tpu_custom_call.1} parent=1 // pred_check
      _
    $region11: #{tpu_custom_call.1} parent=1 // pred_check_branch
      %38 = sbr.rel (0) target = $region13
    $region12: #{tpu_custom_call.1} parent=1 // pred_region
      _
    $region13: #{tpu_custom_call.1} parent=1 // pred_fallthru
      _
    // Predicated region
    $region14: #{tpu_custom_call.1} parent=1 // pred_check
      _
    $region15: #{tpu_custom_call.1} parent=1 // pred_check_branch
      %40 = sbr.rel (0) target = $region17
    $region16: #{tpu_custom_call.1} parent=1 // pred_region
      %42 = vsyncadd [#allocation6], 0
      %s43 = sshll.u32 %s3, 4
      %s44 = int_to_ptr.hbm [resolvable:$true] %s43
      %s45 = sshll.u32 [#allocation7], 4
      %s46 = int_to_ptr.vmem [resolvable:$true] %s45
      %51 = dma.hbm_to_vmem [thread:$0]  %s44, 1024, %s46, [#allocation6], 64, 64, 4
    $region17: #{tpu_custom_call.1} parent=1 // pred_fallthru
      _
    // Predicated region
    $region18: #{tpu_custom_call.1} parent=1 // pred_check
      _
    $region19: #{tpu_custom_call.1} parent=1 // pred_check_branch
      %53 = sbr.rel (0) target = $region21
    $region20: #{tpu_custom_call.1} parent=1 // pred_region
      _
    $region21: #{tpu_custom_call.1} parent=1 // pred_fallthru
      _
    // Predicated region
    $region22: #{tpu_custom_call.1} parent=1 // pred_check
      _
    $region23: #{tpu_custom_call.1} parent=1 // pred_check_branch
      %55 = sbr.rel (0) target = $region25
    $region24: #{tpu_custom_call.1} parent=1 // pred_region
      %57 = dma.done [#allocation3], 1024
    $region25: #{tpu_custom_call.1} parent=1 // pred_fallthru
      _
    // Predicated region
    $region26: #{tpu_custom_call.1} parent=1 // pred_check
      _
    $region27: #{tpu_custom_call.1} parent=1 // pred_check_branch
      %59 = sbr.rel (0) target = $region29
    $region28: #{tpu_custom_call.1} parent=1 // pred_region
      %61 = dma.done [#allocation6], 8192
    $region29: #{tpu_custom_call.1} parent=1 // pred_fallthru
      _
    // Predicated region
    $region30: #{tpu_custom_call.1} parent=1 // pred_check
      _
    $region31: #{tpu_custom_call.1} parent=1 // pred_check_branch
      %63 = sbr.rel (0) target = $region33
    $region32: #{tpu_custom_call.1} parent=1 // pred_region
      %65 = dma.done [#allocation6], 1024
    $region33: #{tpu_custom_call.1} parent=1 // pred_fallthru
      _
    %v66 = vld [vmem:[#allocation2] sm:$0xff]
    %v67 = vld [vmem:[#allocation2 + $0x8] sm:$0xff]
    %v68 = vld [vmem:[#allocation2 + $0x10] sm:$0xff]
    %v69 = vld [vmem:[#allocation2 + $0x18] sm:$0xff]
    %v70 = vld [vmem:[#allocation2 + $0x20] sm:$0xff]
    %v71 = vld [vmem:[#allocation2 + $0x28] sm:$0xff]
    %v72 = vld [vmem:[#allocation2 + $0x30] sm:$0xff]
    %v73 = vld [vmem:[#allocation2 + $0x38] sm:$0xff]
    %v74 = vpack.c.bf16 %v66, %v66
    %v75 = vpack.c.bf16 %v67, %v67
    %v76 = vpack.c.bf16 %v68, %v68
    %v77 = vpack.c.bf16 %v69, %v69
    %v78 = vpack.c.bf16 %v70, %v70
    %v79 = vpack.c.bf16 %v71, %v71
    %v80 = vpack.c.bf16 %v72, %v72
    %v81 = vpack.c.bf16 %v73, %v73
    %v82 = vld [vmem:[#allocation5] sm:$0xf]
    %v83 = vld [vmem:[#allocation5 + $0x4] sm:$0xf]
    %v84 = vld [vmem:[#allocation5 + $0x8] sm:$0xf]
    %v85 = vld [vmem:[#allocation5 + $0xc] sm:$0xf]
    %v86 = vld [vmem:[#allocation5 + $0x10] sm:$0xf]
    %v87 = vld [vmem:[#allocation5 + $0x14] sm:$0xf]
    %v88 = vld [vmem:[#allocation5 + $0x18] sm:$0xf]
    %v89 = vld [vmem:[#allocation5 + $0x1c] sm:$0xf]
    %v90 = vld [vmem:[#allocation5 + $0x20] sm:$0xf]
    %v91 = vld [vmem:[#allocation5 + $0x24] sm:$0xf]
    %v92 = vld [vmem:[#allocation5 + $0x28] sm:$0xf]
    %v93 = vld [vmem:[#allocation5 + $0x2c] sm:$0xf]
    %v94 = vld [vmem:[#allocation5 + $0x30] sm:$0xf]
    %v95 = vld [vmem:[#allocation5 + $0x34] sm:$0xf]
    %v96 = vld [vmem:[#allocation5 + $0x38] sm:$0xf]
    %v97 = vld [vmem:[#allocation5 + $0x3c] sm:$0xf]
    %v98 = vld [vmem:[#allocation5 + $0x40] sm:$0xf]
    %v99 = vld [vmem:[#allocation5 + $0x44] sm:$0xf]
    %v100 = vld [vmem:[#allocation5 + $0x48] sm:$0xf]
    %v101 = vld [vmem:[#allocation5 + $0x4c] sm:$0xf]
    %v102 = vld [vmem:[#allocation5 + $0x50] sm:$0xf]
    %v103 = vld [vmem:[#allocation5 + $0x54] sm:$0xf]
    %v104 = vld [vmem:[#allocation5 + $0x58] sm:$0xf]
    %v105 = vld [vmem:[#allocation5 + $0x5c] sm:$0xf]
    %v106 = vld [vmem:[#allocation5 + $0x60] sm:$0xf]
    %v107 = vld [vmem:[#allocation5 + $0x64] sm:$0xf]
    %v108 = vld [vmem:[#allocation5 + $0x68] sm:$0xf]
    %v109 = vld [vmem:[#allocation5 + $0x6c] sm:$0xf]
    %v110 = vld [vmem:[#allocation5 + $0x70] sm:$0xf]
    %v111 = vld [vmem:[#allocation5 + $0x74] sm:$0xf]
    %v112 = vld [vmem:[#allocation5 + $0x78] sm:$0xf]
    %v113 = vld [vmem:[#allocation5 + $0x7c] sm:$0xf]
    %v114 = vld [vmem:[#allocation5 + $0x80] sm:$0xf]
    %v115 = vld [vmem:[#allocation5 + $0x84] sm:$0xf]
    %v116 = vld [vmem:[#allocation5 + $0x88] sm:$0xf]
    %v117 = vld [vmem:[#allocation5 + $0x8c] sm:$0xf]
    %v118 = vld [vmem:[#allocation5 + $0x90] sm:$0xf]
    %v119 = vld [vmem:[#allocation5 + $0x94] sm:$0xf]
    %v120 = vld [vmem:[#allocation5 + $0x98] sm:$0xf]
    %v121 = vld [vmem:[#allocation5 + $0x9c] sm:$0xf]
    %v122 = vld [vmem:[#allocation5 + $0xa0] sm:$0xf]
    %v123 = vld [vmem:[#allocation5 + $0xa4] sm:$0xf]
    %v124 = vld [vmem:[#allocation5 + $0xa8] sm:$0xf]
    %v125 = vld [vmem:[#allocation5 + $0xac] sm:$0xf]
    %v126 = vld [vmem:[#allocation5 + $0xb0] sm:$0xf]
    %v127 = vld [vmem:[#allocation5 + $0xb4] sm:$0xf]
    %v128 = vld [vmem:[#allocation5 + $0xb8] sm:$0xf]
    %v129 = vld [vmem:[#allocation5 + $0xbc] sm:$0xf]
    %v130 = vld [vmem:[#allocation5 + $0xc0] sm:$0xf]
    %v131 = vld [vmem:[#allocation5 + $0xc4] sm:$0xf]
    %v132 = vld [vmem:[#allocation5 + $0xc8] sm:$0xf]
    %v133 = vld [vmem:[#allocation5 + $0xcc] sm:$0xf]
    %v134 = vld [vmem:[#allocation5 + $0xd0] sm:$0xf]
    %v135 = vld [vmem:[#allocation5 + $0xd4] sm:$0xf]
    %v136 = vld [vmem:[#allocation5 + $0xd8] sm:$0xf]
    %v137 = vld [vmem:[#allocation5 + $0xdc] sm:$0xf]
    %v138 = vld [vmem:[#allocation5 + $0xe0] sm:$0xf]
    %v139 = vld [vmem:[#allocation5 + $0xe4] sm:$0xf]
    %v140 = vld [vmem:[#allocation5 + $0xe8] sm:$0xf]
    %v141 = vld [vmem:[#allocation5 + $0xec] sm:$0xf]
    %v142 = vld [vmem:[#allocation5 + $0xf0] sm:$0xf]
    %v143 = vld [vmem:[#allocation5 + $0xf4] sm:$0xf]
    %v144 = vld [vmem:[#allocation5 + $0xf8] sm:$0xf]
    %v145 = vld [vmem:[#allocation5 + $0xfc] sm:$0xf]
    %v146 = vld [vmem:[#allocation5 + $0x100] sm:$0xf]
    %v147 = vld [vmem:[#allocation5 + $0x104] sm:$0xf]
    %v148 = vld [vmem:[#allocation5 + $0x108] sm:$0xf]
    %v149 = vld [vmem:[#allocation5 + $0x10c] sm:$0xf]
    %v150 = vld [vmem:[#allocation5 + $0x110] sm:$0xf]
    %v151 = vld [vmem:[#allocation5 + $0x114] sm:$0xf]
    %v152 = vld [vmem:[#allocation5 + $0x118] sm:$0xf]
    %v153 = vld [vmem:[#allocation5 + $0x11c] sm:$0xf]
    %v154 = vld [vmem:[#allocation5 + $0x120] sm:$0xf]
    %v155 = vld [vmem:[#allocation5 + $0x124] sm:$0xf]
    %v156 = vld [vmem:[#allocation5 + $0x128] sm:$0xf]
    %v157 = vld [vmem:[#allocation5 + $0x12c] sm:$0xf]
    %v158 = vld [vmem:[#allocation5 + $0x130] sm:$0xf]
    %v159 = vld [vmem:[#allocation5 + $0x134] sm:$0xf]
    %v160 = vld [vmem:[#allocation5 + $0x138] sm:$0xf]
    %v161 = vld [vmem:[#allocation5 + $0x13c] sm:$0xf]
    %v162 = vld [vmem:[#allocation5 + $0x140] sm:$0xf]
    %v163 = vld [vmem:[#allocation5 + $0x144] sm:$0xf]
    %v164 = vld [vmem:[#allocation5 + $0x148] sm:$0xf]
    %v165 = vld [vmem:[#allocation5 + $0x14c] sm:$0xf]
    %v166 = vld [vmem:[#allocation5 + $0x150] sm:$0xf]
    %v167 = vld [vmem:[#allocation5 + $0x154] sm:$0xf]
    %v168 = vld [vmem:[#allocation5 + $0x158] sm:$0xf]
    %v169 = vld [vmem:[#allocation5 + $0x15c] sm:$0xf]
    %v170 = vld [vmem:[#allocation5 + $0x160] sm:$0xf]
    %v171 = vld [vmem:[#allocation5 + $0x164] sm:$0xf]
    %v172 = vld [vmem:[#allocation5 + $0x168] sm:$0xf]
    %v173 = vld [vmem:[#allocation5 + $0x16c] sm:$0xf]
    %v174 = vld [vmem:[#allocation5 + $0x170] sm:$0xf]
    %v175 = vld [vmem:[#allocation5 + $0x174] sm:$0xf]
    %v176 = vld [vmem:[#allocation5 + $0x178] sm:$0xf]
    %v177 = vld [vmem:[#allocation5 + $0x17c] sm:$0xf]
    %v178 = vld [vmem:[#allocation5 + $0x180] sm:$0xf]
    %v179 = vld [vmem:[#allocation5 + $0x184] sm:$0xf]
    %v180 = vld [vmem:[#allocation5 + $0x188] sm:$0xf]
    %v181 = vld [vmem:[#allocation5 + $0x18c] sm:$0xf]
    %v182 = vld [vmem:[#allocation5 + $0x190] sm:$0xf]
    %v183 = vld [vmem:[#allocation5 + $0x194] sm:$0xf]
    %v184 = vld [vmem:[#allocation5 + $0x198] sm:$0xf]
    %v185 = vld [vmem:[#allocation5 + $0x19c] sm:$0xf]
    %v186 = vld [vmem:[#allocation5 + $0x1a0] sm:$0xf]
    %v187 = vld [vmem:[#allocation5 + $0x1a4] sm:$0xf]
    %v188 = vld [vmem:[#allocation5 + $0x1a8] sm:$0xf]
    %v189 = vld [vmem:[#allocation5 + $0x1ac] sm:$0xf]
    %v190 = vld [vmem:[#allocation5 + $0x1b0] sm:$0xf]
    %v191 = vld [vmem:[#allocation5 + $0x1b4] sm:$0xf]
    %v192 = vld [vmem:[#allocation5 + $0x1b8] sm:$0xf]
    %v193 = vld [vmem:[#allocation5 + $0x1bc] sm:$0xf]
    %v194 = vld [vmem:[#allocation5 + $0x1c0] sm:$0xf]
    %v195 = vld [vmem:[#allocation5 + $0x1c4] sm:$0xf]
    %v196 = vld [vmem:[#allocation5 + $0x1c8] sm:$0xf]
    %v197 = vld [vmem:[#allocation5 + $0x1cc] sm:$0xf]
    %v198 = vld [vmem:[#allocation5 + $0x1d0] sm:$0xf]
    %v199 = vld [vmem:[#allocation5 + $0x1d4] sm:$0xf]
    %v200 = vld [vmem:[#allocation5 + $0x1d8] sm:$0xf]
    %v201 = vld [vmem:[#allocation5 + $0x1dc] sm:$0xf]
    %v202 = vld [vmem:[#allocation5 + $0x1e0] sm:$0xf]
    %v203 = vld [vmem:[#allocation5 + $0x1e4] sm:$0xf]
    %v204 = vld [vmem:[#allocation5 + $0x1e8] sm:$0xf]
    %v205 = vld [vmem:[#allocation5 + $0x1ec] sm:$0xf]
    %v206 = vld [vmem:[#allocation5 + $0x1f0] sm:$0xf]
    %v207 = vld [vmem:[#allocation5 + $0x1f4] sm:$0xf]
    %v208 = vld [vmem:[#allocation5 + $0x1f8] sm:$0xf]
    %v209 = vld [vmem:[#allocation5 + $0x1fc] sm:$0xf]
    %v210 = vld [vmem:[%s2] sm:$0x1]
    %v212 = vperm.slane %v210, 0
    %v342 = vunpack.c.l.b16 %v82
    %v343 = vunpack.c.l.b16 %v83
    %v344 = vunpack.c.l.b16 %v84
    %v345 = vunpack.c.l.b16 %v85
    %v346 = vunpack.c.l.b16 %v86
    %v347 = vunpack.c.l.b16 %v87
    %v348 = vunpack.c.l.b16 %v88
    %v349 = vunpack.c.l.b16 %v89
    %v350 = vunpack.c.l.b16 %v90
    %v351 = vunpack.c.l.b16 %v91
    %v352 = vunpack.c.l.b16 %v92
    %v353 = vunpack.c.l.b16 %v93
    %v354 = vunpack.c.l.b16 %v94
    %v355 = vunpack.c.l.b16 %v95
    %v356 = vunpack.c.l.b16 %v96
    %v357 = vunpack.c.l.b16 %v97
    %v358 = vunpack.c.l.b16 %v98
    %v359 = vunpack.c.l.b16 %v99
    %v360 = vunpack.c.l.b16 %v100
    %v361 = vunpack.c.l.b16 %v101
    %v362 = vunpack.c.l.b16 %v102
    %v363 = vunpack.c.l.b16 %v103
    %v364 = vunpack.c.l.b16 %v104
    %v365 = vunpack.c.l.b16 %v105
    %v366 = vunpack.c.l.b16 %v106
    %v367 = vunpack.c.l.b16 %v107
    %v368 = vunpack.c.l.b16 %v108
    %v369 = vunpack.c.l.b16 %v109
    %v370 = vunpack.c.l.b16 %v110
    %v371 = vunpack.c.l.b16 %v111
    %v372 = vunpack.c.l.b16 %v112
    %v373 = vunpack.c.l.b16 %v113
    %v374 = vunpack.c.l.b16 %v114
    %v375 = vunpack.c.l.b16 %v115
    %v376 = vunpack.c.l.b16 %v116
    %v377 = vunpack.c.l.b16 %v117
    %v378 = vunpack.c.l.b16 %v118
    %v379 = vunpack.c.l.b16 %v119
    %v380 = vunpack.c.l.b16 %v120
    %v381 = vunpack.c.l.b16 %v121
    %v382 = vunpack.c.l.b16 %v122
    %v383 = vunpack.c.l.b16 %v123
    %v384 = vunpack.c.l.b16 %v124
    %v385 = vunpack.c.l.b16 %v125
    %v386 = vunpack.c.l.b16 %v126
    %v387 = vunpack.c.l.b16 %v127
    %v388 = vunpack.c.l.b16 %v128
    %v389 = vunpack.c.l.b16 %v129
    %v390 = vunpack.c.l.b16 %v130
    %v391 = vunpack.c.l.b16 %v131
    %v392 = vunpack.c.l.b16 %v132
    %v393 = vunpack.c.l.b16 %v133
    %v394 = vunpack.c.l.b16 %v134
    %v395 = vunpack.c.l.b16 %v135
    %v396 = vunpack.c.l.b16 %v136
    %v397 = vunpack.c.l.b16 %v137
    %v398 = vunpack.c.l.b16 %v138
    %v399 = vunpack.c.l.b16 %v139
    %v400 = vunpack.c.l.b16 %v140
    %v401 = vunpack.c.l.b16 %v141
    %v402 = vunpack.c.l.b16 %v142
    %v403 = vunpack.c.l.b16 %v143
    %v404 = vunpack.c.l.b16 %v144
    %v405 = vunpack.c.l.b16 %v145
    %v406 = vunpack.c.l.b16 %v146
    %v407 = vunpack.c.l.b16 %v147
    %v408 = vunpack.c.l.b16 %v148
    %v409 = vunpack.c.l.b16 %v149
    %v410 = vunpack.c.l.b16 %v150
    %v411 = vunpack.c.l.b16 %v151
    %v412 = vunpack.c.l.b16 %v152
    %v413 = vunpack.c.l.b16 %v153
    %v414 = vunpack.c.l.b16 %v154
    %v415 = vunpack.c.l.b16 %v155
    %v416 = vunpack.c.l.b16 %v156
    %v417 = vunpack.c.l.b16 %v157
    %v418 = vunpack.c.l.b16 %v158
    %v419 = vunpack.c.l.b16 %v159
    %v420 = vunpack.c.l.b16 %v160
    %v421 = vunpack.c.l.b16 %v161
    %v422 = vunpack.c.l.b16 %v162
    %v423 = vunpack.c.l.b16 %v163
    %v424 = vunpack.c.l.b16 %v164
    %v425 = vunpack.c.l.b16 %v165
    %v426 = vunpack.c.l.b16 %v166
    %v427 = vunpack.c.l.b16 %v167
    %v428 = vunpack.c.l.b16 %v168
    %v429 = vunpack.c.l.b16 %v169
    %v430 = vunpack.c.l.b16 %v170
    %v431 = vunpack.c.l.b16 %v171
    %v432 = vunpack.c.l.b16 %v172
    %v433 = vunpack.c.l.b16 %v173
    %v434 = vunpack.c.l.b16 %v174
    %v435 = vunpack.c.l.b16 %v175
    %v436 = vunpack.c.l.b16 %v176
    %v437 = vunpack.c.l.b16 %v177
    %v438 = vunpack.c.l.b16 %v178
    %v439 = vunpack.c.l.b16 %v179
    %v440 = vunpack.c.l.b16 %v180
    %v441 = vunpack.c.l.b16 %v181
    %v442 = vunpack.c.l.b16 %v182
    %v443 = vunpack.c.l.b16 %v183
    %v444 = vunpack.c.l.b16 %v184
    %v445 = vunpack.c.l.b16 %v185
    %v446 = vunpack.c.l.b16 %v186
    %v447 = vunpack.c.l.b16 %v187
    %v448 = vunpack.c.l.b16 %v188
    %v449 = vunpack.c.l.b16 %v189
    %v450 = vunpack.c.l.b16 %v190
    %v451 = vunpack.c.l.b16 %v191
    %v452 = vunpack.c.l.b16 %v192
    %v453 = vunpack.c.l.b16 %v193
    %v454 = vunpack.c.l.b16 %v194
    %v455 = vunpack.c.l.b16 %v195
    %v456 = vunpack.c.l.b16 %v196
    %v457 = vunpack.c.l.b16 %v197
    %v458 = vunpack.c.l.b16 %v198
    %v459 = vunpack.c.l.b16 %v199
    %v460 = vunpack.c.l.b16 %v200
    %v461 = vunpack.c.l.b16 %v201
    %v462 = vunpack.c.l.b16 %v202
    %v463 = vunpack.c.l.b16 %v203
    %v464 = vunpack.c.l.b16 %v204
    %v465 = vunpack.c.l.b16 %v205
    %v466 = vunpack.c.l.b16 %v206
    %v467 = vunpack.c.l.b16 %v207
    %v468 = vunpack.c.l.b16 %v208
    %v469 = vunpack.c.l.b16 %v209
    %v470 = vpack.c.b16 %v343, %v342
    %v471 = vpack.c.b16 %v345, %v344
    %v472 = vpack.c.b16 %v347, %v346
    %v473 = vpack.c.b16 %v349, %v348
    %v474 = vpack.c.b16 %v351, %v350
    %v475 = vpack.c.b16 %v353, %v352
    %v476 = vpack.c.b16 %v355, %v354
    %v477 = vpack.c.b16 %v357, %v356
    %v478 = vpack.c.b16 %v359, %v358
    %v479 = vpack.c.b16 %v361, %v360
    %v480 = vpack.c.b16 %v363, %v362
    %v481 = vpack.c.b16 %v365, %v364
    %v482 = vpack.c.b16 %v367, %v366
    %v483 = vpack.c.b16 %v369, %v368
    %v484 = vpack.c.b16 %v371, %v370
    %v485 = vpack.c.b16 %v373, %v372
    %v486 = vpack.c.b16 %v375, %v374
    %v487 = vpack.c.b16 %v377, %v376
    %v488 = vpack.c.b16 %v379, %v378
    %v489 = vpack.c.b16 %v381, %v380
    %v490 = vpack.c.b16 %v383, %v382
    %v491 = vpack.c.b16 %v385, %v384
    %v492 = vpack.c.b16 %v387, %v386
    %v493 = vpack.c.b16 %v389, %v388
    %v494 = vpack.c.b16 %v391, %v390
    %v495 = vpack.c.b16 %v393, %v392
    %v496 = vpack.c.b16 %v395, %v394
    %v497 = vpack.c.b16 %v397, %v396
    %v498 = vpack.c.b16 %v399, %v398
    %v499 = vpack.c.b16 %v401, %v400
    %v500 = vpack.c.b16 %v403, %v402
    %v501 = vpack.c.b16 %v405, %v404
    %v502 = vpack.c.b16 %v407, %v406
    %v503 = vpack.c.b16 %v409, %v408
    %v504 = vpack.c.b16 %v411, %v410
    %v505 = vpack.c.b16 %v413, %v412
    %v506 = vpack.c.b16 %v415, %v414
    %v507 = vpack.c.b16 %v417, %v416
    %v508 = vpack.c.b16 %v419, %v418
    %v509 = vpack.c.b16 %v421, %v420
    %v510 = vpack.c.b16 %v423, %v422
    %v511 = vpack.c.b16 %v425, %v424
    %v512 = vpack.c.b16 %v427, %v426
    %v513 = vpack.c.b16 %v429, %v428
    %v514 = vpack.c.b16 %v431, %v430
    %v515 = vpack.c.b16 %v433, %v432
    %v516 = vpack.c.b16 %v435, %v434
    %v517 = vpack.c.b16 %v437, %v436
    %v518 = vpack.c.b16 %v439, %v438
    %v519 = vpack.c.b16 %v441, %v440
    %v520 = vpack.c.b16 %v443, %v442
    %v521 = vpack.c.b16 %v445, %v444
    %v522 = vpack.c.b16 %v447, %v446
    %v523 = vpack.c.b16 %v449, %v448
    %v524 = vpack.c.b16 %v451, %v450
    %v525 = vpack.c.b16 %v453, %v452
    %v526 = vpack.c.b16 %v455, %v454
    %v527 = vpack.c.b16 %v457, %v456
    %v528 = vpack.c.b16 %v459, %v458
    %v529 = vpack.c.b16 %v461, %v460
    %v530 = vpack.c.b16 %v463, %v462
    %v531 = vpack.c.b16 %v465, %v464
    %v532 = vpack.c.b16 %v467, %v466
    %v533 = vpack.c.b16 %v469, %v468
    %598 = vmatpush.bf16.msra.mxu0 %v477
    %599 = vmatpush.bf16.msra.mxu0 %v476
    %600 = vmatpush.bf16.msra.mxu0 %v475
    %601 = vmatpush.bf16.msra.mxu0 %v474
    %602 = vmatpush.bf16.msra.mxu0 %v473
    %603 = vmatpush.bf16.msra.mxu0 %v472
    %604 = vmatpush.bf16.msra.mxu0 %v471
    %605 = vmatpush.bf16.msra.mxu0 %v470
    %606 = vmatmul.bf16.gmra.mxu0 %v74
    %v607 = vpop.f32.mrf.mxu0
    %v608 = vadd.f32 %v212, %v607
    %v609 = vpop.f32.mrf.mxu0
    %610 = vdwg.mxu0
    %611 = vmatpush.bf16.msra.mxu0 %v485
    %612 = vmatpush.bf16.msra.mxu0 %v484
    %613 = vmatpush.bf16.msra.mxu0 %v483
    %614 = vmatpush.bf16.msra.mxu0 %v482
    %615 = vmatpush.bf16.msra.mxu0 %v481
    %616 = vmatpush.bf16.msra.mxu0 %v480
    %617 = vmatpush.bf16.msra.mxu0 %v479
    %618 = vmatpush.bf16.msra.mxu0 %v478
    %619 = vmatmul.bf16.gmra.mxu0 %v75
    %v620 = vpop.f32.mrf.mxu0
    %v621 = vadd.f32 %v608, %v620
    %v622 = vpop.f32.mrf.mxu0
    %623 = vdwg.mxu0
    %624 = vmatpush.bf16.msra.mxu0 %v493
    %625 = vmatpush.bf16.msra.mxu0 %v492
    %626 = vmatpush.bf16.msra.mxu0 %v491
    %627 = vmatpush.bf16.msra.mxu0 %v490
    %628 = vmatpush.bf16.msra.mxu0 %v489
    %629 = vmatpush.bf16.msra.mxu0 %v488
    %630 = vmatpush.bf16.msra.mxu0 %v487
    %631 = vmatpush.bf16.msra.mxu0 %v486
    %632 = vmatmul.bf16.gmra.mxu0 %v76
    %v633 = vpop.f32.mrf.mxu0
    %v634 = vadd.f32 %v621, %v633
    %v635 = vpop.f32.mrf.mxu0
    %636 = vdwg.mxu0
    %637 = vmatpush.bf16.msra.mxu0 %v501
    %638 = vmatpush.bf16.msra.mxu0 %v500
    %639 = vmatpush.bf16.msra.mxu0 %v499
    %640 = vmatpush.bf16.msra.mxu0 %v498
    %641 = vmatpush.bf16.msra.mxu0 %v497
    %642 = vmatpush.bf16.msra.mxu0 %v496
    %643 = vmatpush.bf16.msra.mxu0 %v495
    %644 = vmatpush.bf16.msra.mxu0 %v494
    %645 = vmatmul.bf16.gmra.mxu0 %v77
    %v646 = vpop.f32.mrf.mxu0
    %v647 = vadd.f32 %v634, %v646
    %v648 = vpop.f32.mrf.mxu0
    %649 = vdwg.mxu0
    %650 = vmatpush.bf16.msra.mxu0 %v509
    %651 = vmatpush.bf16.msra.mxu0 %v508
    %652 = vmatpush.bf16.msra.mxu0 %v507
    %653 = vmatpush.bf16.msra.mxu0 %v506
    %654 = vmatpush.bf16.msra.mxu0 %v505
    %655 = vmatpush.bf16.msra.mxu0 %v504
    %656 = vmatpush.bf16.msra.mxu0 %v503
    %657 = vmatpush.bf16.msra.mxu0 %v502
    %658 = vmatmul.bf16.gmra.mxu0 %v78
    %v659 = vpop.f32.mrf.mxu0
    %v660 = vadd.f32 %v647, %v659
    %v661 = vpop.f32.mrf.mxu0
    %662 = vdwg.mxu0
    %663 = vmatpush.bf16.msra.mxu0 %v517
    %664 = vmatpush.bf16.msra.mxu0 %v516
    %665 = vmatpush.bf16.msra.mxu0 %v515
    %666 = vmatpush.bf16.msra.mxu0 %v514
    %667 = vmatpush.bf16.msra.mxu0 %v513
    %668 = vmatpush.bf16.msra.mxu0 %v512
    %669 = vmatpush.bf16.msra.mxu0 %v511
    %670 = vmatpush.bf16.msra.mxu0 %v510
    %671 = vmatmul.bf16.gmra.mxu0 %v79
    %v672 = vpop.f32.mrf.mxu0
    %v673 = vadd.f32 %v660, %v672
    %v674 = vpop.f32.mrf.mxu0
    %675 = vdwg.mxu0
    %676 = vmatpush.bf16.msra.mxu0 %v525
    %677 = vmatpush.bf16.msra.mxu0 %v524
    %678 = vmatpush.bf16.msra.mxu0 %v523
    %679 = vmatpush.bf16.msra.mxu0 %v522
    %680 = vmatpush.bf16.msra.mxu0 %v521
    %681 = vmatpush.bf16.msra.mxu0 %v520
    %682 = vmatpush.bf16.msra.mxu0 %v519
    %683 = vmatpush.bf16.msra.mxu0 %v518
    %684 = vmatmul.bf16.gmra.mxu0 %v80
    %v685 = vpop.f32.mrf.mxu0
    %v686 = vadd.f32 %v673, %v685
    %v687 = vpop.f32.mrf.mxu0
    %688 = vdwg.mxu0
    %689 = vmatpush.bf16.msra.mxu0 %v533
    %690 = vmatpush.bf16.msra.mxu0 %v532
    %691 = vmatpush.bf16.msra.mxu0 %v531
    %692 = vmatpush.bf16.msra.mxu0 %v530
    %693 = vmatpush.bf16.msra.mxu0 %v529
    %694 = vmatpush.bf16.msra.mxu0 %v528
    %695 = vmatpush.bf16.msra.mxu0 %v527
    %696 = vmatpush.bf16.msra.mxu0 %v526
    %697 = vmatmul.bf16.gmra.mxu0 %v81
    %v698 = vpop.f32.mrf.mxu0
    %v699 = vadd.f32 %v686, %v698
    %v700 = vpop.f32.mrf.mxu0
    %701 = vdwg.mxu0
    %v702 = vmax.f32 %v699, 0.0
    %v703 = vpack.c.bf16 %v702, %v702
    %v704 = vld [vmem:[#allocation7] sm:$0xf]
    %v705 = vld [vmem:[#allocation7 + $0x4] sm:$0xf]
    %v706 = vld [vmem:[#allocation7 + $0x8] sm:$0xf]
    %v707 = vld [vmem:[#allocation7 + $0xc] sm:$0xf]
    %v708 = vld [vmem:[#allocation7 + $0x10] sm:$0xf]
    %v709 = vld [vmem:[#allocation7 + $0x14] sm:$0xf]
    %v710 = vld [vmem:[#allocation7 + $0x18] sm:$0xf]
    %v711 = vld [vmem:[#allocation7 + $0x1c] sm:$0xf]
    %v712 = vld [vmem:[#allocation7 + $0x20] sm:$0xf]
    %v713 = vld [vmem:[#allocation7 + $0x24] sm:$0xf]
    %v714 = vld [vmem:[#allocation7 + $0x28] sm:$0xf]
    %v715 = vld [vmem:[#allocation7 + $0x2c] sm:$0xf]
    %v716 = vld [vmem:[#allocation7 + $0x30] sm:$0xf]
    %v717 = vld [vmem:[#allocation7 + $0x34] sm:$0xf]
    %v718 = vld [vmem:[#allocation7 + $0x38] sm:$0xf]
    %v719 = vld [vmem:[#allocation7 + $0x3c] sm:$0xf]
    %v720 = vld [vmem:[%s4] sm:$0x1]
    %v722 = vperm.slane %v720, 0
    %v740 = vunpack.c.l.b16 %v704
    %v741 = vunpack.c.l.b16 %v705
    %v742 = vunpack.c.l.b16 %v706
    %v743 = vunpack.c.l.b16 %v707
    %v744 = vunpack.c.l.b16 %v708
    %v745 = vunpack.c.l.b16 %v709
    %v746 = vunpack.c.l.b16 %v710
    %v747 = vunpack.c.l.b16 %v711
    %v748 = vunpack.c.l.b16 %v712
    %v749 = vunpack.c.l.b16 %v713
    %v750 = vunpack.c.l.b16 %v714
    %v751 = vunpack.c.l.b16 %v715
    %v752 = vunpack.c.l.b16 %v716
    %v753 = vunpack.c.l.b16 %v717
    %v754 = vunpack.c.l.b16 %v718
    %v755 = vunpack.c.l.b16 %v719
    %v756 = vpack.c.b16 %v741, %v740
    %v757 = vpack.c.b16 %v743, %v742
    %v758 = vpack.c.b16 %v745, %v744
    %v759 = vpack.c.b16 %v747, %v746
    %v760 = vpack.c.b16 %v749, %v748
    %v761 = vpack.c.b16 %v751, %v750
    %v762 = vpack.c.b16 %v753, %v752
    %v763 = vpack.c.b16 %v755, %v754
    %772 = vmatpush.bf16.msra.mxu0 %v763
    %773 = vmatpush.bf16.msra.mxu0 %v762
    %774 = vmatpush.bf16.msra.mxu0 %v761
    %775 = vmatpush.bf16.msra.mxu0 %v760
    %776 = vmatpush.bf16.msra.mxu0 %v759
    %777 = vmatpush.bf16.msra.mxu0 %v758
    %778 = vmatpush.bf16.msra.mxu0 %v757
    %779 = vmatpush.bf16.msra.mxu0 %v756
    %780 = vmatmul.bf16.gmra.mxu0 %v703
    %v781 = vpop.f32.mrf.mxu0
    %v782 = vadd.f32 %v722, %v781
    %v783 = vpop.f32.mrf.mxu0
    %784 = vdwg.mxu0
    %v785 = vlaneseq
    %v786 = vand.u32 %v785, 127
    %vm787 = vcmp.lt.s32.totalorder %v786, 15
    %v788 = vsel %vm787, %v782, -inf
    %789 = vmax.xlane.f32.xlu0 %v788
    %v790 = vpop.xlane.xlu0 %789
    %v791 = vsub.f32 %v788, %v790
    %v792 = vmul.f32 %v791, 1.442695
    %v793 = vpow.pop %v792
    %794 = vadd.xlane.f32.xlu0 %v793
    %v795 = vpop.xlane.xlu0 %794
    %v796 = vlog2.pop %v795
    %v797 = vmul.f32 %v796, 0.6931472
    %v798 = vsub.f32 %v791, %v797
    %v799 = vsel %vm787, %v798, %v782
    %800 = vst [vmem:[#allocation8] sm:$0xff] %v799
    // Predicated region
    $region34: #{tpu_custom_call.1} parent=1 // pred_check
      _
    $region35: #{tpu_custom_call.1} parent=1 // pred_check_branch
      %802 = sbr.rel (0) target = $region37
    $region36: #{tpu_custom_call.1} parent=1 // pred_region
      %804 = vsyncadd [#allocation4], 0
      %s806 = sshll.u32 [#allocation8], 4
      %s807 = int_to_ptr.vmem [resolvable:$true] %s806
      %s808 = sshll.u32 %s5, 4
      %s809 = int_to_ptr.hbm [resolvable:$true] %s808
      %811 = dma.vmem_to_hbm [thread:$0]  %s807, 128, %s809, [#allocation4]
    $region37: #{tpu_custom_call.1} parent=1 // pred_fallthru
      _
    // Predicated region
    $region38: #{tpu_custom_call.1} parent=1 // pred_check
      _
    $region39: #{tpu_custom_call.1} parent=1 // pred_check_branch
      %813 = sbr.rel (0) target = $region41
    $region40: #{tpu_custom_call.1} parent=1 // pred_region
      %815 = dma.done [#allocation4], 128
    $region41: #{tpu_custom_call.1} parent=1 // pred_fallthru
      _
    %816 = vsyncpa [#allocation3], 1
    %817 = vsyncpa [#allocation6], 1
    %818 = vsyncpa [#allocation4], 1

</llo_original>
